<compile_context>
chip_gen: v6e
topology: v6e:2x2x1
jax: 0.10.0
libtpu: 0.0.40
codegen_flags: <defaults>
</compile_context>

<pallas_src>
import jax
import jax.numpy as jnp
from jax.experimental import pallas as pl
from jax.experimental.pallas import tpu as pltpu


def _round_up(x, m):
    return (x + m - 1) // m * m


def _downsample_conv_kernel(x_ref, w_ref, b_ref, o_ref):
    """One (image, row-tile) step of the 3x3 / stride-2 convolution.

    x_ref : (2, (tho+1)*Wo, Kc)  row-parity slabs; kx taps folded into Kc=3*Cin
                                 and rows already flattened with Wo, so every
                                 slice below is a contiguous 2-D ref view.
    w_ref : (3, Kc, Cp)          per-ky weight slab, Cout padded to Cp (x128)
    b_ref : (1, Cp)              f32 bias
    o_ref : (tho*Wo, Cp)         lane-dense output rows for this tile
    """
    m = o_ref.shape[0]                 # tho * Wo
    halo = x_ref.shape[1] - m          # == Wo  (one output-row halo)

    # ky = 0 : even input rows 2i     -> parity-0 rows [0, tho)
    # ky = 1 : odd  input rows 2i + 1 -> parity-1 rows [0, tho)
    # ky = 2 : even input rows 2i + 2 -> parity-0 rows [1, tho]  (halo row)
    # Bias folded into the accumulator init; accumulate in f32.
    acc = b_ref[...] + jnp.dot(x_ref[0, 0:m], w_ref[0],
                               preferred_element_type=jnp.float32)
    acc = acc + jnp.dot(x_ref[1, 0:m], w_ref[1],
                        preferred_element_type=jnp.float32)
    acc = acc + jnp.dot(x_ref[0, halo:halo + m], w_ref[2],
                        preferred_element_type=jnp.float32)
    o_ref[...] = acc.astype(o_ref.dtype)


def _vmem_limit_bytes():
    """Per-generation VMEM limit with headroom for Mosaic internal scratch."""
    phys = 64 * 1024 * 1024                      # conservative default (v7x)
    try:
        info = pltpu.get_tpu_info()
        phys = int(getattr(info, "vmem_capacity_bytes", phys)) or phys
    except Exception:
        pass
    # ~1/6 headroom: v7x (64 MiB) -> ~53 MiB, v5e/v6e (128 MiB) -> ~106 MiB.
    return (phys * 5) // 6


def _choose_row_tile(Ho, Wo, Kc, Cp, isz, osz, vmem_limit, w_bytes):
    """Largest output-row tile whose per-step working set fits the budget."""
    # Per-step VMEM: double-buffered input/output blocks + f32 accumulator.
    per_row = 4 * Wo * Kc * isz + 2 * Wo * Cp * osz + Wo * Cp * 4
    fixed = 4 * Wo * Kc * isz                    # the duplicated halo row
    slack = 6 << 20                              # Mosaic scratch / relayouts
    budget = vmem_limit - 2 * w_bytes - fixed - slack
    budget = max(budget, per_row)                # always allow tho = 1
    tho = int(max(1, min(Ho, budget // per_row)))
    # Prefer an exact divisor of Ho (no padded tail tile) unless it costs more
    # than half of the VMEM-derived tile size.
    for d in range(tho, 0, -1):
        if Ho % d == 0:
            return d if 2 * d >= tho else tho
    return tho


def downsample_forward_nhwc(x_nhwc, weight, bias, *, compute_dtype="auto"):
    """Conv2d(C, C, 3, stride 2, pad 1) on NHWC input. Returns NHWC output."""
    N, H, W, C = x_nhwc.shape
    Cout, Cin, kh, kw = weight.shape
    assert (kh, kw) == (3, 3) and Cin == C

    Ho, Wo = (H + 1) // 2, (W + 1) // 2
    Hop, Wop = Ho + 1, Wo + 1
    Cp = _round_up(Cout, 128)        # lane-dense output / weight lanes
    Kc = 3 * Cin                     # kx taps folded into the contraction dim

    if isinstance(compute_dtype, str) and compute_dtype == "auto":
        cdt = jnp.bfloat16 if x_nhwc.dtype == jnp.float32 else x_nhwc.dtype
    else:
        cdt = x_nhwc.dtype if compute_dtype is None else compute_dtype
    out_dtype = x_nhwc.dtype
    isz = jnp.dtype(cdt).itemsize
    osz = jnp.dtype(out_dtype).itemsize

    # ---- weights: per-ky slab with (kx, ci) flattened into K, Cout padded ----
    w_t = jnp.transpose(weight, (2, 3, 1, 0)).reshape(3, Kc, Cout)
    w_t = jnp.pad(w_t, ((0, 0), (0, 0), (0, Cp - Cout))).astype(cdt)
    b_p = jnp.pad(bias.astype(jnp.float32).reshape(1, Cout),
                  ((0, 0), (0, Cp - Cout)))

    vmem_limit = _vmem_limit_bytes()
    w_bytes = 3 * Kc * Cp * isz + Cp * 4
    tho = _choose_row_tile(Ho, Wo, Kc, Cp, isz, osz, vmem_limit, w_bytes)
    num_tiles = -(-Ho // tho)

    # ---- input repack (one fused XLA pass; cast fused in) -------------------
    # Pad so the padded image is exactly (2*Hop, 2*Wop), then split row/column
    # parity: xs[n, p, q, i, j, c] == x_pad[n, 2i+p, 2j+q, c].
    xp = jnp.pad(x_nhwc,
                 ((0, 0), (1, 2 * Hop - H - 1), (1, 2 * Wop - W - 1), (0, 0)))
    xs = xp.reshape(N, Hop, 2, Wop, 2, C).transpose(0, 2, 4, 1, 3, 5)
    xs = xs.astype(cdt)                                  # (N, 2, 2, Hop, Wop, C)
    # Fold the 3 kx taps into the channel (contraction) dim: K = 3*Cin.
    xf = jnp.concatenate(
        [xs[:, :, 0, :, :Wo, :],                         # kx = 0  (col 2j)
         xs[:, :, 1, :, :Wo, :],                         # kx = 1  (col 2j + 1)
         xs[:, :, 0, :, 1:Wo + 1, :]],                   # kx = 2  (col 2j + 2)
        axis=-1)                                         # (N, 2, Hop, Wo, Kc)
    # Row tiles with a duplicated 1-row halo; rows flattened with Wo so kernel
    # dot operands are contiguous 2-D ref slices (no in-kernel relayout).
    if num_tiles == 1:
        xt = xf.reshape(N, 1, 2, Hop * Wo, Kc)
    else:
        row_idx = jnp.minimum(
            jnp.arange(num_tiles)[:, None] * tho
            + jnp.arange(tho + 1)[None, :], Hop - 1).reshape(-1)
        xt = jnp.take(xf, row_idx, axis=2)               # (N, 2, T*(tho+1), Wo, Kc)
        xt = xt.reshape(N, 2, num_tiles, tho + 1, Wo, Kc)
        xt = xt.transpose(0, 2, 1, 3, 4, 5).reshape(
            N, num_tiles, 2, (tho + 1) * Wo, Kc)
    # TODO(synk): for extreme W or Cout also tile the W / Cout axes, and move
    # this repack into the kernel via strided DMAs from a pl.ANY input.

    out = pl.pallas_call(
        _downsample_conv_kernel,
        out_shape=jax.ShapeDtypeStruct((N, num_tiles, tho * Wo, Cp), out_dtype),
        grid_spec=pltpu.PrefetchScalarGridSpec(
            num_scalar_prefetch=0,
            grid=(N, num_tiles),
            in_specs=[
                pl.BlockSpec((None, None, 2, (tho + 1) * Wo, Kc),
                             lambda n, r: (n, r, 0, 0, 0)),
                # Weight / bias have constant index maps -> DMA'd once.
                # TODO(synk): pipeline_mode=pl.Buffered(1) to drop the second
                # buffer once it is supported on all deployed jax versions.
                pl.BlockSpec((3, Kc, Cp), lambda n, r: (0, 0, 0)),
                pl.BlockSpec((1, Cp), lambda n, r: (0, 0)),
            ],
            out_specs=pl.BlockSpec((None, None, tho * Wo, Cp),
                                   lambda n, r: (n, r, 0, 0)),
        ),
        compiler_params=pltpu.CompilerParams(
            dimension_semantics=("parallel", "parallel"),
            vmem_limit_bytes=int(vmem_limit),
        ),
    )(xt, w_t, b_p)

    out = out.reshape(N, num_tiles * tho, Wo, Cp)
    if num_tiles * tho != Ho:
        out = out[:, :Ho]
    if Cp != Cout:
        out = out[..., :Cout]
    return out


def downsample_forward(x_nchw, weight, bias, t=None, *, compute_dtype="auto"):
    """DownSample.forward(x, t) for NCHW input (PyTorch layout); `t` unused.

    Prefer downsample_forward_nhwc end-to-end to avoid the two transposes.
    """
    del t  # unused, matches the PyTorch module
    x_nhwc = jnp.transpose(x_nchw, (0, 2, 3, 1))
    out_nhwc = downsample_forward_nhwc(x_nhwc, weight, bias,
                                       compute_dtype=compute_dtype)
    return jnp.transpose(out_nhwc, (0, 3, 1, 2))


if __name__ == "__main__":
    key = jax.random.PRNGKey(0)
    k_x, k_w, k_b, k_t = jax.random.split(key, 4)

    N, C, H, W = 2, 4, 16, 16
    x = jax.random.normal(k_x, (N, C, H, W), dtype=jnp.float32)
    t = jax.random.normal(k_t, (N, 32), dtype=jnp.float32)   # ignored by forward

    # Deterministic parameter init (PyTorch-style uniform bound 1/sqrt(fan_in))
    fan_in = C * 3 * 3
    bound = 1.0 / (fan_in ** 0.5)
    weight = jax.random.uniform(k_w, (C, C, 3, 3), jnp.float32, -bound, bound)
    bias = jax.random.uniform(k_b, (C,), jnp.float32, -bound, bound)

    # Reference: XLA conv (same semantics as nn.Conv2d(k=3, s=2, p=1))
    ref = jax.lax.conv_general_dilated(
        x, weight, window_strides=(2, 2), padding=((1, 1), (1, 1)),
        dimension_numbers=("NCHW", "OIHW", "NCHW"),
    ) + bias.reshape(1, C, 1, 1)

    # Exact path (f32 compute, f32 accumulate) — tight tolerance.
    out_f32 = jax.block_until_ready(
        downsample_forward(x, weight, bias, t, compute_dtype=jnp.float32))
    assert out_f32.shape == (N, C, 8, 8)
    assert jnp.allclose(out_f32, ref, atol=1e-5, rtol=1e-5)

    # Default fast path (bf16 compute, f32 accumulate) — looser tolerance.
    out_bf16 = jax.block_until_ready(downsample_forward(x, weight, bias, t))
    assert out_bf16.shape == (N, C, 8, 8)
    assert jnp.allclose(out_bf16, ref, atol=3e-2, rtol=3e-2)

    print("KERNEL_OK")
</pallas_src>

<mosaic_0001>
module attributes {stable_mosaic.version = 11 : i64} {
  func.func @_downsample_conv_kernel(%arg0: i32, %arg1: i32, %arg2: memref<1x1x2x72x12xf32, #tpu.memory_space<vmem>>, %arg3: memref<3x12x128xf32, #tpu.memory_space<vmem>>, %arg4: memref<1x128xf32, #tpu.memory_space<vmem>>, %arg5: memref<1x1x64x128xf32, #tpu.memory_space<vmem>>) attributes {dimension_semantics = [#tpu.dimension_semantics<parallel>, #tpu.dimension_semantics<parallel>], iteration_bounds = array<i64: 2, 1>, scalar_prefetch = 0 : i64, scratch_operands = 0 : i64, tpu.core_type = #tpu.core_type<tc>, window_params = [{transform_indices = @transform_0, window_bounds = array<i64: 1, 1, 2, 72, 12>}, {pipeline_mode = #tpu.pipeline_mode<synchronous>, transform_indices = @transform_1, window_bounds = array<i64: 3, 12, 128>}, {pipeline_mode = #tpu.pipeline_mode<synchronous>, transform_indices = @transform_2, window_bounds = array<i64: 1, 128>}, {transform_indices = @transform_3, window_bounds = array<i64: 1, 1, 64, 128>}]} {
    %c0 = arith.constant 0 : index
    %c0_0 = arith.constant 0 : index
    %0 = vector.load %arg4[%c0, %c0_0] : memref<1x128xf32, #tpu.memory_space<vmem>>, vector<1x128xf32>
    %c0_1 = arith.constant 0 : index
    %c0_2 = arith.constant 0 : index
    %c0_3 = arith.constant 0 : index
    %c0_4 = arith.constant 0 : index
    %c0_5 = arith.constant 0 : index
    %1 = vector.load %arg2[%c0_1, %c0_2, %c0_3, %c0_4, %c0_5] : memref<1x1x2x72x12xf32, #tpu.memory_space<vmem>>, vector<1x1x1x64x12xf32>
    %2 = vector.shape_cast %1 : vector<1x1x1x64x12xf32> to vector<64x12xf32>
    %c0_6 = arith.constant 0 : index
    %c0_7 = arith.constant 0 : index
    %c0_8 = arith.constant 0 : index
    %3 = vector.load %arg3[%c0_6, %c0_7, %c0_8] : memref<3x12x128xf32, #tpu.memory_space<vmem>>, vector<1x12x128xf32>
    %4 = vector.shape_cast %3 : vector<1x12x128xf32> to vector<12x128xf32>
    %cst = arith.constant dense<0.000000e+00> : vector<64x128xf32>
    %5 = tpu.matmul %2, %4, %cst {dimension_numbers = #tpu.dot_dimension_numbers<[1], [0], [0], [1], [0, 0, 1, 1], [], []>} : vector<64x12xf32>, vector<12x128xf32>, vector<64x128xf32> -> vector<64x128xf32>
    %6 = vector.broadcast %0 : vector<1x128xf32> to vector<64x128xf32>
    %7 = arith.addf %6, %5 : vector<64x128xf32>
    %c0_9 = arith.constant 0 : index
    %c0_10 = arith.constant 0 : index
    %c1 = arith.constant 1 : index
    %c0_11 = arith.constant 0 : index
    %c0_12 = arith.constant 0 : index
    %8 = vector.load %arg2[%c0_9, %c0_10, %c1, %c0_11, %c0_12] : memref<1x1x2x72x12xf32, #tpu.memory_space<vmem>>, vector<1x1x1x64x12xf32>
    %9 = vector.shape_cast %8 : vector<1x1x1x64x12xf32> to vector<64x12xf32>
    %c1_13 = arith.constant 1 : index
    %c0_14 = arith.constant 0 : index
    %c0_15 = arith.constant 0 : index
    %10 = vector.load %arg3[%c1_13, %c0_14, %c0_15] : memref<3x12x128xf32, #tpu.memory_space<vmem>>, vector<1x12x128xf32>
    %11 = vector.shape_cast %10 : vector<1x12x128xf32> to vector<12x128xf32>
    %cst_16 = arith.constant dense<0.000000e+00> : vector<64x128xf32>
    %12 = tpu.matmul %9, %11, %cst_16 {dimension_numbers = #tpu.dot_dimension_numbers<[1], [0], [0], [1], [0, 0, 1, 1], [], []>} : vector<64x12xf32>, vector<12x128xf32>, vector<64x128xf32> -> vector<64x128xf32>
    %13 = arith.addf %7, %12 : vector<64x128xf32>
    %c0_17 = arith.constant 0 : index
    %c0_18 = arith.constant 0 : index
    %c0_19 = arith.constant 0 : index
    %c8 = arith.constant 8 : index
    %c0_20 = arith.constant 0 : index
    %14 = vector.load %arg2[%c0_17, %c0_18, %c0_19, %c8, %c0_20] : memref<1x1x2x72x12xf32, #tpu.memory_space<vmem>>, vector<1x1x1x64x12xf32>
    %15 = vector.shape_cast %14 : vector<1x1x1x64x12xf32> to vector<64x12xf32>
    %c2 = arith.constant 2 : index
    %c0_21 = arith.constant 0 : index
    %c0_22 = arith.constant 0 : index
    %16 = vector.load %arg3[%c2, %c0_21, %c0_22] : memref<3x12x128xf32, #tpu.memory_space<vmem>>, vector<1x12x128xf32>
    %17 = vector.shape_cast %16 : vector<1x12x128xf32> to vector<12x128xf32>
    %cst_23 = arith.constant dense<0.000000e+00> : vector<64x128xf32>
    %18 = tpu.matmul %15, %17, %cst_23 {dimension_numbers = #tpu.dot_dimension_numbers<[1], [0], [0], [1], [0, 0, 1, 1], [], []>} : vector<64x12xf32>, vector<12x128xf32>, vector<64x128xf32> -> vector<64x128xf32>
    %19 = arith.addf %13, %18 : vector<64x128xf32>
    %c0_24 = arith.constant 0 : index
    %c0_25 = arith.constant 0 : index
    %c0_26 = arith.constant 0 : index
    %c0_27 = arith.constant 0 : index
    %20 = vector.load %arg5[%c0_24, %c0_25, %c0_26, %c0_27] : memref<1x1x64x128xf32, #tpu.memory_space<vmem>>, vector<1x1x64x128xf32>
    %21 = vector.shape_cast %20 : vector<1x1x64x128xf32> to vector<64x128xf32>
    %22 = vector.shape_cast %19 : vector<64x128xf32> to vector<1x1x64x128xf32>
    tpu.vector_store %arg5[%c0_24, %c0_25, %c0_26, %c0_27], %22 {strides = array<i32>} : memref<1x1x64x128xf32, #tpu.memory_space<vmem>>, vector<1x1x64x128xf32>,
    return
  }
  func.func @transform_0(%arg0: i32, %arg1: i32) -> (i32, i32, i32, i32, i32) {
    %c0_i32 = arith.constant 0 : i32
    %c0_i32_0 = arith.constant 0 : i32
    %c0_i32_1 = arith.constant 0 : i32
    %c0_i32_2 = arith.constant 0 : i32
    return %arg0, %arg1, %c0_i32, %c0_i32_0, %c0_i32_1 : i32, i32, i32, i32, i32
  }
  func.func @transform_1(%arg0: i32, %arg1: i32) -> (i32, i32, i32) {
    %c0_i32 = arith.constant 0 : i32
    %c0_i32_0 = arith.constant 0 : i32
    %c0_i32_1 = arith.constant 0 : i32
    %c0_i32_2 = arith.constant 0 : i32
    return %c0_i32, %c0_i32_0, %c0_i32_1 : i32, i32, i32
  }
  func.func @transform_2(%arg0: i32, %arg1: i32) -> (i32, i32) {
    %c0_i32 = arith.constant 0 : i32
    %c0_i32_0 = arith.constant 0 : i32
    %c0_i32_1 = arith.constant 0 : i32
    return %c0_i32, %c0_i32_0 : i32, i32
  }
  func.func @transform_3(%arg0: i32, %arg1: i32) -> (i32, i32, i32, i32) {
    %c0_i32 = arith.constant 0 : i32
    %c0_i32_0 = arith.constant 0 : i32
    %c0_i32_1 = arith.constant 0 : i32
    return %arg0, %arg1, %c0_i32, %c0_i32_0 : i32, i32, i32, i32
  }
}

</mosaic_0001>

<llo_original>
// kernel: tpu_custom_call.1
$region0: #{tpu_custom_call.1}
  #allocation0 [shape = 'u32[]', space=smem, size = 0x4, offset = 0x4, fixed_abs, tag = 'smem constant byte address 0x4 - core index']
  #allocation1 [shape = 'u32[144,128]{1,0:T(1,128)}', space=vmem, size = 0x12000, scoped, tag = 'internal scratch']
  %s0 = inlined_call_operand.vmem [shape: f32[2,1,2,72,12], index: 0, kind: input, shape index: {}]
  %s1 = inlined_call_operand.vmem [shape: f32[3,12,128], index: 1, kind: input, shape index: {}]
  %s2 = inlined_call_operand.vmem [shape: f32[1,128], index: 2, kind: input, shape index: {}]
  %s3 = inlined_call_operand.hbm [shape: f32[2,1,64,128], index: 3, kind: output, shape index: {}]
  %s4 = sld [smem:[#allocation0]]
  $region45: #{tpu_custom_call.1} parent=0
    _
  %s6 = ssub.s32 1, %s4
  %s7 = scalar_select 0, %s6, %s4
  $region1: #{tpu_custom_call.1} parent=0
    #allocation2 [shape = 'u8[65536]{0}', space=vmem, size = 0x10000, scoped, tag = 'output window, operand 0']
    #allocation3 [shape = 's32[2]{0}', space=sflag, size = 0x8, scoped, tag = 'scoped memory for tpu_custom_call.1']
    %8 = vsyncpa [#allocation3], 0
    %s9 = scalar_lea.sflag [#allocation3], 1
    %10 = vsyncpa %s9, 0
    loop: start=0, step=1, limit=4
    $region2: #{tpu_custom_call.1} parent=1 // loop_pre_header
      _
    $region3: #{tpu_custom_call.1} parent=1 // loop_header
      %s12 = sphi 0, %s16
      %p13 = scmp.ge.s32.totalorder %s12, 4
      %s19 = sphi 0, %s31
      %s20 = sphi 0, %s27
      %s21 = sphi 0, %s19
      %s22 = sphi 0, %s20
      %s23 = sphi 0, %s21
      %s24 = sphi 0, %s22
      %s36 = sphi 0, %s38
      %s39 = sphi 0, %s36
      %s40 = sphi 0, %s39
      %s56 = sphi 0, %s40
      %s60 = sphi 0, %s60
      %s62 = sphi 0, %s60
      %s63 = sphi 0, %s62
      %s77 = sphi 0, %s63
      %s81 = sphi 0, %s81
      %s83 = sphi 0, %s81
      %s84 = sphi 0, %s83
      %s98 = sphi 0, %s84
      %s106 = sphi 0, %s108
      %s109 = sphi 0, %s106
      %s110 = sphi 0, %s109
      %s126 = sphi 0, %s110
    $region4: #{tpu_custom_call.1} parent=1 // loop_header_branch
      %15 = sbr.rel (%p13) target = $region8
    $region5: #{tpu_custom_call.1} parent=1 // loop_body
      %s17 = ssub.s32 %s12, 1
      %s18 = ssub.s32 %s12, 2
      %s25 = sadd.s32 1, %s20
      %p26 = scmp.ge.s32.totalorder %s25, 1
      %s27 = scalar_select %p26, 0, %s25
      %s28 = sadd.s32 1, %s19
      %s29 = scalar_select %p26, %s28, %s19
      %p30 = scmp.ge.s32.totalorder %s29, 2
      %s31 = scalar_select %p30, 0, %s29
      %s32 = ssub.s32 %s19, %s31
      %s33 = ssub.s32 %s20, %s27
      %s34 = sor.u32 %s32, %s33
      %p35 = scmp.eq.s32.totalorder %s34, 0
      %s37 = sadd.s32 %s36, 1
      %s38 = scalar_select %p35, %s36, %s37
      %p41 = pneg %p35
      %p42 = scmp.eq.s32.totalorder %s12, 1
      %p43 = por %p41, %p42
      %p44 = scmp.ne.s32.totalorder %s36, %s39
      %p45 = scmp.eq.s32.totalorder %s12, 0
      %p46 = por %p44, %p45
      %p47 = scmp.ne.s32.totalorder %s36, %s39
      %p48 = scmp.eq.s32.totalorder %s17, 1
      %p49 = por %p47, %p48
      %p50 = scmp.ne.s32.totalorder %s39, %s40
      %p51 = scmp.eq.s32.totalorder %s17, 0
      %p52 = por %p50, %p51
      %p53 = scmp.ne.s32.totalorder %s39, %s40
      %p54 = scmp.eq.s32.totalorder %s18, 1
      %p55 = por %p53, %p54
      %p57 = scmp.ne.s32.totalorder %s40, %s56
      %p58 = scmp.eq.s32.totalorder %s18, 0
      %p59 = por %p57, %p58
      %s61 = sadd.s32 %s60, 1
      %p64 = scmp.eq.s32.totalorder %s12, 1
      %p65 = scmp.ne.s32.totalorder %s60, %s62
      %p66 = scmp.eq.s32.totalorder %s12, 0
      %p67 = por %p65, %p66
      %p68 = scmp.ne.s32.totalorder %s60, %s62
      %p69 = scmp.eq.s32.totalorder %s17, 1
      %p70 = por %p68, %p69
      %p71 = scmp.ne.s32.totalorder %s62, %s63
      %p72 = scmp.eq.s32.totalorder %s17, 0
      %p73 = por %p71, %p72
      %p74 = scmp.ne.s32.totalorder %s62, %s63
      %p75 = scmp.eq.s32.totalorder %s18, 1
      %p76 = por %p74, %p75
      %p78 = scmp.ne.s32.totalorder %s63, %s77
      %p79 = scmp.eq.s32.totalorder %s18, 0
      %p80 = por %p78, %p79
      %s82 = sadd.s32 %s81, 1
      %p85 = scmp.eq.s32.totalorder %s12, 1
      %p86 = scmp.ne.s32.totalorder %s81, %s83
      %p87 = scmp.eq.s32.totalorder %s12, 0
      %p88 = por %p86, %p87
      %p89 = scmp.ne.s32.totalorder %s81, %s83
      %p90 = scmp.eq.s32.totalorder %s17, 1
      %p91 = por %p89, %p90
      %p92 = scmp.ne.s32.totalorder %s83, %s84
      %p93 = scmp.eq.s32.totalorder %s17, 0
      %p94 = por %p92, %p93
      %p95 = scmp.ne.s32.totalorder %s83, %s84
      %p96 = scmp.eq.s32.totalorder %s18, 1
      %p97 = por %p95, %p96
      %p99 = scmp.ne.s32.totalorder %s84, %s98
      %p100 = scmp.eq.s32.totalorder %s18, 0
      %p101 = por %p99, %p100
      %s102 = ssub.s32 %s19, %s31
      %s103 = ssub.s32 %s20, %s27
      %s104 = sor.u32 %s102, %s103
      %p105 = scmp.eq.s32.totalorder %s104, 0
      %s107 = sadd.s32 %s106, 1
      %s108 = scalar_select %p105, %s106, %s107
      %p111 = pneg %p105
      %p112 = scmp.eq.s32.totalorder %s12, 1
      %p113 = por %p111, %p112
      %p114 = scmp.ne.s32.totalorder %s106, %s109
      %p115 = scmp.eq.s32.totalorder %s12, 0
      %p116 = por %p114, %p115
      %p117 = scmp.ne.s32.totalorder %s106, %s109
      %p118 = scmp.eq.s32.totalorder %s17, 1
      %p119 = por %p117, %p118
      %p120 = scmp.ne.s32.totalorder %s109, %s110
      %p121 = scmp.eq.s32.totalorder %s17, 0
      %p122 = por %p120, %p121
      %p123 = scmp.ne.s32.totalorder %s109, %s110
      %p124 = scmp.eq.s32.totalorder %s18, 1
      %p125 = por %p123, %p124
      %p127 = scmp.ne.s32.totalorder %s110, %s126
      %p128 = scmp.eq.s32.totalorder %s18, 0
      %p129 = por %p127, %p128
      %p130 = scmp.le.s32.totalorder 1, %s12
      %p131 = scmp.lt.s32.totalorder %s12, 3
      %p132 = pnand %p130, %p131
      %p133 = pneg %p132
      // Predicated region
      $region9: #{tpu_custom_call.1} parent=5 // pred_check
        _
      $region10: #{tpu_custom_call.1} parent=5 // pred_check_branch
        %135 = sbr.rel (%p132) target = $region12
      $region11: #{tpu_custom_call.1} parent=5 // pred_region
        %s136 = ssub.s32 %s12, 1
        // Predicated region
        $region13: #{tpu_custom_call.1} parent=11 // pred_check
          %p137 = pneg %p73
        $region14: #{tpu_custom_call.1} parent=11 // pred_check_branch
          %139 = sbr.rel (%p137) target = $region16
        $region15: #{tpu_custom_call.1} parent=11 // pred_region
          _
        $region16: #{tpu_custom_call.1} parent=11 // pred_fallthru
          _
        // Predicated region
        $region17: #{tpu_custom_call.1} parent=11 // pred_check
          %p140 = pneg %p94
        $region18: #{tpu_custom_call.1} parent=11 // pred_check_branch
          %142 = sbr.rel (%p140) target = $region20
        $region19: #{tpu_custom_call.1} parent=11 // pred_region
          _
        $region20: #{tpu_custom_call.1} parent=11 // pred_fallthru
          _
      $region12: #{tpu_custom_call.1} parent=5 // pred_fallthru
        _
      %p143 = scmp.lt.s32.totalorder %s12, 2
      // Predicated region
      $region21: #{tpu_custom_call.1} parent=5 // pred_check
        %p144 = pneg %p143
      $region22: #{tpu_custom_call.1} parent=5 // pred_check_branch
        %146 = sbr.rel (%p144) target = $region24
      $region23: #{tpu_custom_call.1} parent=5 // pred_region
        // Predicated region
        $region25: #{tpu_custom_call.1} parent=23 // pred_check
          %p147 = pneg %p46
        $region26: #{tpu_custom_call.1} parent=23 // pred_check_branch
          %149 = sbr.rel (%p147) target = $region28
        $region27: #{tpu_custom_call.1} parent=23 // pred_region
          %p150 = scmp.lt.s32.totalorder %s19, 1
          %s151 = scalar_select %p150, %s19, 1
          %p152 = scmp.lt.s32.totalorder %s20, 0
          %s153 = scalar_select %p152, %s20, 0
          %s154 = smul.addr %s153, 18
          %s155 = smul.addr %s151, 18
          %s156 = sadd.s32 %s154, %s155
          %s157 = smul.addr %s156, 8
          %s158 = scalar_lea.vmem %s0, %s157
        $region28: #{tpu_custom_call.1} parent=23 // pred_fallthru
          _
      $region24: #{tpu_custom_call.1} parent=5 // pred_fallthru
        _
      %p159 = scmp.le.s32.totalorder 1, %s12
      %p160 = scmp.lt.s32.totalorder %s12, 3
      %p161 = pnand %p159, %p160
      %p162 = pneg %p161
      // Predicated region
      $region29: #{tpu_custom_call.1} parent=5 // pred_check
        _
      $region30: #{tpu_custom_call.1} parent=5 // pred_check_branch
        %164 = sbr.rel (%p161) target = $region32
      $region31: #{tpu_custom_call.1} parent=5 // pred_region
        %s165 = ssub.s32 %s12, 1
        %p166 = scmp.lt.s32.totalorder %s21, 1
        %s167 = scalar_select %p166, %s21, 1
        %p168 = scmp.lt.s32.totalorder %s22, 0
        %s169 = scalar_select %p168, %s22, 0
        %s170 = smul.addr %s169, 18
        %s171 = smul.addr %s167, 18
        %s172 = sadd.s32 %s170, %s171
        %s173 = smul.addr %s172, 8
        %s174 = scalar_lea.vmem %s0, %s173
        %p175 = pneg %p52
        %p176 = pneg %p49
        %p177 = pneg %p73
        %p178 = pneg %p70
        %p179 = pneg %p94
        %p180 = pneg %p91
        %p181 = pneg %p122
        %p182 = pneg %p119
        %s183 = sand.u32 %s109, 1
        %s184 = scalar_lea.sflag [#allocation3], %s183
        %s185 = sand.u32 %s109, 1
        %s186 = smul.addr %s185, 64
        %s187 = scalar_lea.vmem [#allocation2], %s186
        %p188 = scmp.lt.s32.totalorder %s21, 1
        %s189 = scalar_select %p188, %s21, 1
        %p190 = scmp.lt.s32.totalorder %s22, 0
        %s191 = scalar_select %p190, %s22, 0
        %s192 = smul.addr %s191, 18
        %s193 = smul.addr %s189, 18
        %s194 = sadd.s32 %s192, %s193
        %s195 = smul.addr %s194, 8
        %s196 = scalar_lea.vmem %s0, %s195
        %v197 = vld [vmem:[%s2] sm:$0x1]
        %v198 = vld [vmem:[%s196] sm:$0xff]
        %v199 = vld [vmem:[%s196 + $0x8] sm:$0xff]
        %v200 = vld [vmem:[%s196 + $0x10] sm:$0xff]
        %v201 = vld [vmem:[%s196 + $0x18] sm:$0xff]
        %v202 = vld [vmem:[%s196 + $0x20] sm:$0xff]
        %v203 = vld [vmem:[%s196 + $0x28] sm:$0xff]
        %v204 = vld [vmem:[%s196 + $0x30] sm:$0xff]
        %v205 = vld [vmem:[%s196 + $0x38] sm:$0xff]
        %v206 = vld [vmem:[%s1] sm:$0xff]
        %v207 = vld [vmem:[%s1 + $0x8] sm:$0xf]
        %vm208 = vcmask 97280
        %v210 = vsel %vm208, %v198, 0
        %v213 = vsel %vm208, %v199, 0
        %v216 = vsel %vm208, %v200, 0
        %v219 = vsel %vm208, %v201, 0
        %v222 = vsel %vm208, %v202, 0
        %v225 = vsel %vm208, %v203, 0
        %v228 = vsel %vm208, %v204, 0
        %v231 = vsel %vm208, %v205, 0
        %vm233 = vcmask 1043456
        %v235 = vsel %vm233, %v207, 0
        %237 = vmatprep.subr.mxu0 0.0
        %238 = vmatpush1.msra.mxu0 0.0
        %239 = vmatprep.subr.mxu0 0.0
        %240 = vmatpush1.msra.mxu0 0.0
        %241 = vmatprep.subr.mxu0 0.0
        %242 = vmatpush1.msra.mxu0 0.0
        %243 = vmatprep.subr.mxu0 0.0
        %244 = vmatpush1.msra.mxu0 0.0
        %245 = vmatprep.subr.mxu0 0.0
        %246 = vmatpush1.msra.mxu0 0.0
        %247 = vmatprep.subr.mxu0 0.0
        %248 = vmatpush1.msra.mxu0 0.0
        %249 = vmatprep.subr.mxu0 0.0
        %250 = vmatpush1.msra.mxu0 0.0
        %251 = vmatprep.subr.mxu0 0.0
        %252 = vmatpush1.msra.mxu0 0.0
        %253 = vmatprep.subr.mxu0 0.0
        %254 = vmatpush1.msra.mxu0 0.0
        %255 = vmatprep.subr.mxu0 0.0
        %256 = vmatpush1.msra.mxu0 0.0
        %257 = vmatprep.subr.mxu0 0.0
        %258 = vmatpush1.msra.mxu0 0.0
        %259 = vmatprep.subr.mxu0 0.0
        %260 = vmatpush1.msra.mxu0 0.0
        %261 = vmatprep.subr.mxu0 0.0
        %262 = vmatpush1.msra.mxu0 0.0
        %263 = vmatprep.subr.mxu0 0.0
        %264 = vmatpush1.msra.mxu0 0.0
        %265 = vmatprep.subr.mxu0 0.0
        %266 = vmatpush1.msra.mxu0 %v235
        %267 = vmatprep.subr.mxu0 0.0
        %268 = vmatpush1.msra.mxu0 %v206
        %269 = vmatprep.subr.mxu0 0.0
        %270 = vmatpush2.msra.mxu0 0.0
        %271 = vmatprep.subr.mxu0 0.0
        %272 = vmatpush2.msra.mxu0 0.0
        %273 = vmatprep.subr.mxu0 0.0
        %274 = vmatpush2.msra.mxu0 0.0
        %275 = vmatprep.subr.mxu0 0.0
        %276 = vmatpush2.msra.mxu0 0.0
        %277 = vmatprep.subr.mxu0 0.0
        %278 = vmatpush2.msra.mxu0 0.0
        %279 = vmatprep.subr.mxu0 0.0
        %280 = vmatpush2.msra.mxu0 0.0
        %281 = vmatprep.subr.mxu0 0.0
        %282 = vmatpush2.msra.mxu0 0.0
        %283 = vmatprep.subr.mxu0 0.0
        %284 = vmatpush2.msra.mxu0 0.0
        %285 = vmatprep.subr.mxu0 0.0
        %286 = vmatpush2.msra.mxu0 0.0
        %287 = vmatprep.subr.mxu0 0.0
        %288 = vmatpush2.msra.mxu0 0.0
        %289 = vmatprep.subr.mxu0 0.0
        %290 = vmatpush2.msra.mxu0 0.0
        %291 = vmatprep.subr.mxu0 0.0
        %292 = vmatpush2.msra.mxu0 0.0
        %293 = vmatprep.subr.mxu0 0.0
        %294 = vmatpush2.msra.mxu0 0.0
        %295 = vmatprep.subr.mxu0 0.0
        %296 = vmatpush2.msra.mxu0 0.0
        %297 = vmatprep.subr.mxu0 0.0
        %298 = vmatpush2.msra.mxu0 0.0
        %299 = vmatprep.subr.mxu0 0.0
        %300 = vmatpush2.msra.mxu0 0.0
        %301 = vmatprep.mubr.f32.mxu0 0.0
        %302 = vmatmul.mubr.f32.gmra.mxu0 %v210
        %v303 = vpop.f32.mrf.mxu0
        %v304 = vadd.f32 0.0, %v303
        %v305 = vpop.f32.mrf.mxu0
        %306 = vmatprep.mubr.f32.mxu0 0.0
        %307 = vmatmul.mubr.f32.gmra.mxu0 %v213
        %v308 = vpop.f32.mrf.mxu0
        %v309 = vadd.f32 0.0, %v308
        %v310 = vpop.f32.mrf.mxu0
        %311 = vmatprep.mubr.f32.mxu0 0.0
        %312 = vmatmul.mubr.f32.gmra.mxu0 %v216
        %v313 = vpop.f32.mrf.mxu0
        %v314 = vadd.f32 0.0, %v313
        %v315 = vpop.f32.mrf.mxu0
        %316 = vmatprep.mubr.f32.mxu0 0.0
        %317 = vmatmul.mubr.f32.gmra.mxu0 %v219
        %v318 = vpop.f32.mrf.mxu0
        %v319 = vadd.f32 0.0, %v318
        %v320 = vpop.f32.mrf.mxu0
        %321 = vmatprep.mubr.f32.mxu0 0.0
        %322 = vmatmul.mubr.f32.gmra.mxu0 %v222
        %v323 = vpop.f32.mrf.mxu0
        %v324 = vadd.f32 0.0, %v323
        %v325 = vpop.f32.mrf.mxu0
        %326 = vmatprep.mubr.f32.mxu0 0.0
        %327 = vmatmul.mubr.f32.gmra.mxu0 %v225
        %v328 = vpop.f32.mrf.mxu0
        %v329 = vadd.f32 0.0, %v328
        %v330 = vpop.f32.mrf.mxu0
        %331 = vmatprep.mubr.f32.mxu0 0.0
        %332 = vmatmul.mubr.f32.gmra.mxu0 %v228
        %v333 = vpop.f32.mrf.mxu0
        %v334 = vadd.f32 0.0, %v333
        %v335 = vpop.f32.mrf.mxu0
        %336 = vmatprep.mubr.f32.mxu0 0.0
        %337 = vmatmul.mubr.f32.gmra.mxu0 %v231
        %v338 = vpop.f32.mrf.mxu0
        %v339 = vadd.f32 0.0, %v338
        %v340 = vpop.f32.mrf.mxu0
        %341 = vdwg.mxu0
        %v343 = vlaneseq
        %v344 = vshrl.u32 %v343, 7
        %v345 = vsub.s32 0, %v344
        %v346 = vrot.slane %v197, %v345
        %v348 = vadd.f32 %v346, %v304
        %v349 = vadd.f32 %v346, %v309
        %v350 = vadd.f32 %v346, %v314
        %v351 = vadd.f32 %v346, %v319
        %v352 = vadd.f32 %v346, %v324
        %v353 = vadd.f32 %v346, %v329
        %v354 = vadd.f32 %v346, %v334
        %v355 = vadd.f32 %v346, %v339
        %s356 = scalar_lea.vmem %s196, 72
        %v357 = vld [vmem:[%s356] sm:$0xff]
        %v358 = vld [vmem:[%s356 + $0x8] sm:$0xff]
        %v359 = vld [vmem:[%s356 + $0x10] sm:$0xff]
        %v360 = vld [vmem:[%s356 + $0x18] sm:$0xff]
        %v361 = vld [vmem:[%s356 + $0x20] sm:$0xff]
        %v362 = vld [vmem:[%s356 + $0x28] sm:$0xff]
        %v363 = vld [vmem:[%s356 + $0x30] sm:$0xff]
        %v364 = vld [vmem:[%s356 + $0x38] sm:$0xff]
        %s365 = scalar_lea.vmem %s1, 16
        %v366 = vld [vmem:[%s365] sm:$0xff]
        %v367 = vld [vmem:[%s365 + $0x8] sm:$0xf]
        %v369 = vsel %vm208, %v357, 0
        %v372 = vsel %vm208, %v358, 0
        %v375 = vsel %vm208, %v359, 0
        %v378 = vsel %vm208, %v360, 0
        %v381 = vsel %vm208, %v361, 0
        %v384 = vsel %vm208, %v362, 0
        %v387 = vsel %vm208, %v363, 0
        %v390 = vsel %vm208, %v364, 0
        %v393 = vsel %vm233, %v367, 0
        %395 = vmatprep.subr.mxu0 0.0
        %396 = vmatpush1.msra.mxu0 0.0
        %397 = vmatprep.subr.mxu0 0.0
        %398 = vmatpush1.msra.mxu0 0.0
        %399 = vmatprep.subr.mxu0 0.0
        %400 = vmatpush1.msra.mxu0 0.0
        %401 = vmatprep.subr.mxu0 0.0
        %402 = vmatpush1.msra.mxu0 0.0
        %403 = vmatprep.subr.mxu0 0.0
        %404 = vmatpush1.msra.mxu0 0.0
        %405 = vmatprep.subr.mxu0 0.0
        %406 = vmatpush1.msra.mxu0 0.0
        %407 = vmatprep.subr.mxu0 0.0
        %408 = vmatpush1.msra.mxu0 0.0
        %409 = vmatprep.subr.mxu0 0.0
        %410 = vmatpush1.msra.mxu0 0.0
        %411 = vmatprep.subr.mxu0 0.0
        %412 = vmatpush1.msra.mxu0 0.0
        %413 = vmatprep.subr.mxu0 0.0
        %414 = vmatpush1.msra.mxu0 0.0
        %415 = vmatprep.subr.mxu0 0.0
        %416 = vmatpush1.msra.mxu0 0.0
        %417 = vmatprep.subr.mxu0 0.0
        %418 = vmatpush1.msra.mxu0 0.0
        %419 = vmatprep.subr.mxu0 0.0
        %420 = vmatpush1.msra.mxu0 0.0
        %421 = vmatprep.subr.mxu0 0.0
        %422 = vmatpush1.msra.mxu0 0.0
        %423 = vmatprep.subr.mxu0 0.0
        %424 = vmatpush1.msra.mxu0 %v393
        %425 = vmatprep.subr.mxu0 0.0
        %426 = vmatpush1.msra.mxu0 %v366
        %427 = vmatprep.subr.mxu0 0.0
        %428 = vmatpush2.msra.mxu0 0.0
        %429 = vmatprep.subr.mxu0 0.0
        %430 = vmatpush2.msra.mxu0 0.0
        %431 = vmatprep.subr.mxu0 0.0
        %432 = vmatpush2.msra.mxu0 0.0
        %433 = vmatprep.subr.mxu0 0.0
        %434 = vmatpush2.msra.mxu0 0.0
        %435 = vmatprep.subr.mxu0 0.0
        %436 = vmatpush2.msra.mxu0 0.0
        %437 = vmatprep.subr.mxu0 0.0
        %438 = vmatpush2.msra.mxu0 0.0
        %439 = vmatprep.subr.mxu0 0.0
        %440 = vmatpush2.msra.mxu0 0.0
        %441 = vmatprep.subr.mxu0 0.0
        %442 = vmatpush2.msra.mxu0 0.0
        %443 = vmatprep.subr.mxu0 0.0
        %444 = vmatpush2.msra.mxu0 0.0
        %445 = vmatprep.subr.mxu0 0.0
        %446 = vmatpush2.msra.mxu0 0.0
        %447 = vmatprep.subr.mxu0 0.0
        %448 = vmatpush2.msra.mxu0 0.0
        %449 = vmatprep.subr.mxu0 0.0
        %450 = vmatpush2.msra.mxu0 0.0
        %451 = vmatprep.subr.mxu0 0.0
        %452 = vmatpush2.msra.mxu0 0.0
        %453 = vmatprep.subr.mxu0 0.0
        %454 = vmatpush2.msra.mxu0 0.0
        %455 = vmatprep.subr.mxu0 0.0
        %456 = vmatpush2.msra.mxu0 0.0
        %457 = vmatprep.subr.mxu0 0.0
        %458 = vmatpush2.msra.mxu0 0.0
        %459 = vmatprep.mubr.f32.mxu0 0.0
        %460 = vmatmul.mubr.f32.gmra.mxu0 %v369
        %v461 = vpop.f32.mrf.mxu0
        %v462 = vadd.f32 0.0, %v461
        %v463 = vpop.f32.mrf.mxu0
        %464 = vmatprep.mubr.f32.mxu0 0.0
        %465 = vmatmul.mubr.f32.gmra.mxu0 %v372
        %v466 = vpop.f32.mrf.mxu0
        %v467 = vadd.f32 0.0, %v466
        %v468 = vpop.f32.mrf.mxu0
        %469 = vmatprep.mubr.f32.mxu0 0.0
        %470 = vmatmul.mubr.f32.gmra.mxu0 %v375
        %v471 = vpop.f32.mrf.mxu0
        %v472 = vadd.f32 0.0, %v471
        %v473 = vpop.f32.mrf.mxu0
        %474 = vmatprep.mubr.f32.mxu0 0.0
        %475 = vmatmul.mubr.f32.gmra.mxu0 %v378
        %v476 = vpop.f32.mrf.mxu0
        %v477 = vadd.f32 0.0, %v476
        %v478 = vpop.f32.mrf.mxu0
        %479 = vmatprep.mubr.f32.mxu0 0.0
        %480 = vmatmul.mubr.f32.gmra.mxu0 %v381
        %v481 = vpop.f32.mrf.mxu0
        %v482 = vadd.f32 0.0, %v481
        %v483 = vpop.f32.mrf.mxu0
        %484 = vmatprep.mubr.f32.mxu0 0.0
        %485 = vmatmul.mubr.f32.gmra.mxu0 %v384
        %v486 = vpop.f32.mrf.mxu0
        %v487 = vadd.f32 0.0, %v486
        %v488 = vpop.f32.mrf.mxu0
        %489 = vmatprep.mubr.f32.mxu0 0.0
        %490 = vmatmul.mubr.f32.gmra.mxu0 %v387
        %v491 = vpop.f32.mrf.mxu0
        %v492 = vadd.f32 0.0, %v491
        %v493 = vpop.f32.mrf.mxu0
        %494 = vmatprep.mubr.f32.mxu0 0.0
        %495 = vmatmul.mubr.f32.gmra.mxu0 %v390
        %v496 = vpop.f32.mrf.mxu0
        %v497 = vadd.f32 0.0, %v496
        %v498 = vpop.f32.mrf.mxu0
        %499 = vdwg.mxu0
        %v500 = vadd.f32 %v348, %v462
        %v501 = vadd.f32 %v349, %v467
        %v502 = vadd.f32 %v350, %v472
        %v503 = vadd.f32 %v351, %v477
        %v504 = vadd.f32 %v352, %v482
        %v505 = vadd.f32 %v353, %v487
        %v506 = vadd.f32 %v354, %v492
        %v507 = vadd.f32 %v355, %v497
        %v508 = vld [vmem:[%s196 + $0x8] sm:$0xff]
        %v509 = vld [vmem:[%s196 + $0x10] sm:$0xff]
        %v510 = vld [vmem:[%s196 + $0x18] sm:$0xff]
        %v511 = vld [vmem:[%s196 + $0x20] sm:$0xff]
        %v512 = vld [vmem:[%s196 + $0x28] sm:$0xff]
        %v513 = vld [vmem:[%s196 + $0x30] sm:$0xff]
        %v514 = vld [vmem:[%s196 + $0x38] sm:$0xff]
        %v515 = vld [vmem:[%s196 + $0x40] sm:$0xff]
        %s516 = scalar_lea.vmem %s1, 32
        %v517 = vld [vmem:[%s516] sm:$0xff]
        %v518 = vld [vmem:[%s516 + $0x8] sm:$0xf]
        %v520 = vsel %vm208, %v508, 0
        %v523 = vsel %vm208, %v509, 0
        %v526 = vsel %vm208, %v510, 0
        %v529 = vsel %vm208, %v511, 0
        %v532 = vsel %vm208, %v512, 0
        %v535 = vsel %vm208, %v513, 0
        %v538 = vsel %vm208, %v514, 0
        %v541 = vsel %vm208, %v515, 0
        %v544 = vsel %vm233, %v518, 0
        %546 = vmatprep.subr.mxu0 0.0
        %547 = vmatpush1.msra.mxu0 0.0
        %548 = vmatprep.subr.mxu0 0.0
        %549 = vmatpush1.msra.mxu0 0.0
        %550 = vmatprep.subr.mxu0 0.0
        %551 = vmatpush1.msra.mxu0 0.0
        %552 = vmatprep.subr.mxu0 0.0
        %553 = vmatpush1.msra.mxu0 0.0
        %554 = vmatprep.subr.mxu0 0.0
        %555 = vmatpush1.msra.mxu0 0.0
        %556 = vmatprep.subr.mxu0 0.0
        %557 = vmatpush1.msra.mxu0 0.0
        %558 = vmatprep.subr.mxu0 0.0
        %559 = vmatpush1.msra.mxu0 0.0
        %560 = vmatprep.subr.mxu0 0.0
        %561 = vmatpush1.msra.mxu0 0.0
        %562 = vmatprep.subr.mxu0 0.0
        %563 = vmatpush1.msra.mxu0 0.0
        %564 = vmatprep.subr.mxu0 0.0
        %565 = vmatpush1.msra.mxu0 0.0
        %566 = vmatprep.subr.mxu0 0.0
        %567 = vmatpush1.msra.mxu0 0.0
        %568 = vmatprep.subr.mxu0 0.0
        %569 = vmatpush1.msra.mxu0 0.0
        %570 = vmatprep.subr.mxu0 0.0
        %571 = vmatpush1.msra.mxu0 0.0
        %572 = vmatprep.subr.mxu0 0.0
        %573 = vmatpush1.msra.mxu0 0.0
        %574 = vmatprep.subr.mxu0 0.0
        %575 = vmatpush1.msra.mxu0 %v544
        %576 = vmatprep.subr.mxu0 0.0
        %577 = vmatpush1.msra.mxu0 %v517
        %578 = vmatprep.subr.mxu0 0.0
        %579 = vmatpush2.msra.mxu0 0.0
        %580 = vmatprep.subr.mxu0 0.0
        %581 = vmatpush2.msra.mxu0 0.0
        %582 = vmatprep.subr.mxu0 0.0
        %583 = vmatpush2.msra.mxu0 0.0
        %584 = vmatprep.subr.mxu0 0.0
        %585 = vmatpush2.msra.mxu0 0.0
        %586 = vmatprep.subr.mxu0 0.0
        %587 = vmatpush2.msra.mxu0 0.0
        %588 = vmatprep.subr.mxu0 0.0
        %589 = vmatpush2.msra.mxu0 0.0
        %590 = vmatprep.subr.mxu0 0.0
        %591 = vmatpush2.msra.mxu0 0.0
        %592 = vmatprep.subr.mxu0 0.0
        %593 = vmatpush2.msra.mxu0 0.0
        %594 = vmatprep.subr.mxu0 0.0
        %595 = vmatpush2.msra.mxu0 0.0
        %596 = vmatprep.subr.mxu0 0.0
        %597 = vmatpush2.msra.mxu0 0.0
        %598 = vmatprep.subr.mxu0 0.0
        %599 = vmatpush2.msra.mxu0 0.0
        %600 = vmatprep.subr.mxu0 0.0
        %601 = vmatpush2.msra.mxu0 0.0
        %602 = vmatprep.subr.mxu0 0.0
        %603 = vmatpush2.msra.mxu0 0.0
        %604 = vmatprep.subr.mxu0 0.0
        %605 = vmatpush2.msra.mxu0 0.0
        %606 = vmatprep.subr.mxu0 0.0
        %607 = vmatpush2.msra.mxu0 0.0
        %608 = vmatprep.subr.mxu0 0.0
        %609 = vmatpush2.msra.mxu0 0.0
        %610 = vmatprep.mubr.f32.mxu0 0.0
        %611 = vmatmul.mubr.f32.gmra.mxu0 %v520
        %v612 = vpop.f32.mrf.mxu0
        %v613 = vadd.f32 0.0, %v612
        %v614 = vpop.f32.mrf.mxu0
        %615 = vmatprep.mubr.f32.mxu0 0.0
        %616 = vmatmul.mubr.f32.gmra.mxu0 %v523
        %v617 = vpop.f32.mrf.mxu0
        %v618 = vadd.f32 0.0, %v617
        %v619 = vpop.f32.mrf.mxu0
        %620 = vmatprep.mubr.f32.mxu0 0.0
        %621 = vmatmul.mubr.f32.gmra.mxu0 %v526
        %v622 = vpop.f32.mrf.mxu0
        %v623 = vadd.f32 0.0, %v622
        %v624 = vpop.f32.mrf.mxu0
        %625 = vmatprep.mubr.f32.mxu0 0.0
        %626 = vmatmul.mubr.f32.gmra.mxu0 %v529
        %v627 = vpop.f32.mrf.mxu0
        %v628 = vadd.f32 0.0, %v627
        %v629 = vpop.f32.mrf.mxu0
        %630 = vmatprep.mubr.f32.mxu0 0.0
        %631 = vmatmul.mubr.f32.gmra.mxu0 %v532
        %v632 = vpop.f32.mrf.mxu0
        %v633 = vadd.f32 0.0, %v632
        %v634 = vpop.f32.mrf.mxu0
        %635 = vmatprep.mubr.f32.mxu0 0.0
        %636 = vmatmul.mubr.f32.gmra.mxu0 %v535
        %v637 = vpop.f32.mrf.mxu0
        %v638 = vadd.f32 0.0, %v637
        %v639 = vpop.f32.mrf.mxu0
        %640 = vmatprep.mubr.f32.mxu0 0.0
        %641 = vmatmul.mubr.f32.gmra.mxu0 %v538
        %v642 = vpop.f32.mrf.mxu0
        %v643 = vadd.f32 0.0, %v642
        %v644 = vpop.f32.mrf.mxu0
        %645 = vmatprep.mubr.f32.mxu0 0.0
        %646 = vmatmul.mubr.f32.gmra.mxu0 %v541
        %v647 = vpop.f32.mrf.mxu0
        %v648 = vadd.f32 0.0, %v647
        %v649 = vpop.f32.mrf.mxu0
        %650 = vdwg.mxu0
        %v651 = vadd.f32 %v500, %v613
        %v652 = vadd.f32 %v501, %v618
        %v653 = vadd.f32 %v502, %v623
        %v654 = vadd.f32 %v503, %v628
        %v655 = vadd.f32 %v504, %v633
        %v656 = vadd.f32 %v505, %v638
        %v657 = vadd.f32 %v506, %v643
        %v658 = vadd.f32 %v507, %v648
        %659 = vst [vmem:[%s187] sm:$0xff] %v651
        %660 = vst [vmem:[%s187 + $0x8] sm:$0xff] %v652
        %661 = vst [vmem:[%s187 + $0x10] sm:$0xff] %v653
        %662 = vst [vmem:[%s187 + $0x18] sm:$0xff] %v654
        %663 = vst [vmem:[%s187 + $0x20] sm:$0xff] %v655
        %664 = vst [vmem:[%s187 + $0x28] sm:$0xff] %v656
        %665 = vst [vmem:[%s187 + $0x30] sm:$0xff] %v657
        %666 = vst [vmem:[%s187 + $0x38] sm:$0xff] %v658
        %s667 = sand.u32 %s109, 1
        %s668 = scalar_lea.sflag [#allocation3], %s667
        %s669 = sand.u32 %s109, 1
        %s670 = smul.addr %s669, 64
        %s671 = scalar_lea.vmem [#allocation2], %s670
        // Predicated region
        $region33: #{tpu_custom_call.1} parent=31 // pred_check
          %p672 = pneg %p119
        $region34: #{tpu_custom_call.1} parent=31 // pred_check_branch
          %674 = sbr.rel (%p672) target = $region36
        $region35: #{tpu_custom_call.1} parent=31 // pred_region
          %s676 = ssub.s32 1024, 1024
          %677 = vsyncadd %s668, %s676
          %s678 = smul.addr %s22, 8
          %s679 = smul.addr %s21, 8
          %s680 = sadd.s32 %s678, %s679
          %s681 = smul.addr %s680, 128
          %s682 = scalar_lea.hbm %s3, %s681
          %s683 = sshll.u32 %s671, 4
          %s684 = int_to_ptr.vmem [resolvable:$true] %s683
          %689 = dma.vmem_to_hbm [thread:$0]  %s684, 1024, %s682, %s668, 128, 128, 8
        $region36: #{tpu_custom_call.1} parent=31 // pred_fallthru
          _
      $region32: #{tpu_custom_call.1} parent=5 // pred_fallthru
        _
      %p690 = scmp.le.s32.totalorder 2, %s12
      // Predicated region
      $region37: #{tpu_custom_call.1} parent=5 // pred_check
        %p691 = pneg %p690
      $region38: #{tpu_custom_call.1} parent=5 // pred_check_branch
        %693 = sbr.rel (%p691) target = $region40
      $region39: #{tpu_custom_call.1} parent=5 // pred_region
        %s694 = ssub.s32 %s12, 2
        // Predicated region
        $region41: #{tpu_custom_call.1} parent=39 // pred_check
          %p695 = pneg %p125
        $region42: #{tpu_custom_call.1} parent=39 // pred_check_branch
          %697 = sbr.rel (%p695) target = $region44
        $region43: #{tpu_custom_call.1} parent=39 // pred_region
          %s698 = sand.u32 %s110, 1
          %s699 = scalar_lea.sflag [#allocation3], %s698
          %s700 = sand.u32 %s110, 1
          %s701 = smul.addr %s700, 64
          %s702 = scalar_lea.vmem [#allocation2], %s701
          %703 = dma.done %s699, 1024
        $region44: #{tpu_custom_call.1} parent=39 // pred_fallthru
          _
      $region40: #{tpu_custom_call.1} parent=5 // pred_fallthru
        _
    $region6: #{tpu_custom_call.1} parent=1 // loop_footer
      %s16 = sadd.s32 1, %s12
    $region7: #{tpu_custom_call.1} parent=1 // loop_footer_branch
      %11 = sbr.rel target = $region3
    $region8: #{tpu_custom_call.1} parent=1 // loop_exit
      _
    %704 = vsyncpa [#allocation3], 1
    %s705 = scalar_lea.sflag [#allocation3], 1
    %706 = vsyncpa %s705, 1

</llo_original>
